<compile_context>
chip_gen: v6e
topology: v6e:2x2x1
jax: 0.10.0
libtpu: 0.0.40
codegen_flags: <defaults>
</compile_context>

<pallas_src>
import functools

import jax
import jax.numpy as jnp
from jax.experimental import pallas as pl
from jax.experimental.pallas import tpu as pltpu


def _round_up(x, m):
    return (x + m - 1) // m * m


def _hybrid_embed_kernel(x_ref, wc_ref, bc_ref, o_ref):
    """out = x @ Wc + bc   (backbone patchify-conv + 1x1 proj, folded offline).

    x:  (TM, Cin)  token tile (streamed)
    wc: (Cin, Ep)  folded weights, lane-padded (resident)
    bc: (1, Ep)    folded bias,    lane-padded (resident)
    o:  (TM, Ep)
    """
    acc = jnp.dot(x_ref[...], wc_ref[...], preferred_element_type=jnp.float32)
    o_ref[...] = (acc + bc_ref[...].astype(jnp.float32)).astype(o_ref.dtype)


def _choose_tm(T, Cin, Ep, itemsize, *, tm_max=2048, vmem_budget=12 << 20):
    """Token-tile rows: as large as the double-buffer VMEM budget allows
    (streamed input + output tiles, 2 buffers each), capped at tm_max, and at
    ~T/2 so the 'parallel' grid keeps >= 2 iterations for v7x's 2 TensorCores."""
    t_r8 = _round_up(T, 8)
    per_row = 2 * (Cin + Ep) * itemsize          # double-buffered bytes per token row
    tm_vmem = max(8, (vmem_budget // max(per_row, 1)) // 8 * 8)
    tm = min(tm_max, tm_vmem, t_r8)
    if t_r8 <= tm and t_r8 >= 16:                # everything fits in one tile:
        tm = _round_up(pl.cdiv(t_r8, 2), 8)      # split in two so grid >= 2
    return tm


def _fused_embed(patches, wc_mat, bc_row):
    """(T, Cin) tokens -> (T, Ep) embeddings via one streaming Pallas GEMM."""
    T, Cin = patches.shape
    Ep = wc_mat.shape[1]

    TM = _choose_tm(T, Cin, Ep, patches.dtype.itemsize)
    T_pad = _round_up(T, TM)
    if T_pad != T:
        patches = jnp.pad(patches, ((0, T_pad - T), (0, 0)))

    out = pl.pallas_call(
        _hybrid_embed_kernel,
        out_shape=jax.ShapeDtypeStruct((T_pad, Ep), patches.dtype),
        grid_spec=pltpu.PrefetchScalarGridSpec(
            num_scalar_prefetch=0,
            grid=(T_pad // TM,),
            in_specs=[
                pl.BlockSpec((TM, Cin), lambda i: (i, 0)),   # streamed tokens
                pl.BlockSpec((Cin, Ep), lambda i: (0, 0)),   # resident folded W
                pl.BlockSpec((1, Ep), lambda i: (0, 0)),     # resident folded b
            ],
            out_specs=pl.BlockSpec((TM, Ep), lambda i: (i, 0)),
        ),
        compiler_params=pltpu.CompilerParams(
            # Each token tile is independent -> shard the grid across the 2
            # TensorCores on v7x.
            dimension_semantics=("parallel",),
        ),
    )(patches, wc_mat, bc_row)

    if T_pad != T:                               # un-pad only when we padded
        out = out[:T]
    return out


def hybrid_embed_forward(x_nchw, prep, embed_dim):
    """HybridEmbed.forward: backbone -> 1x1 proj -> flatten(2).transpose(1,2).

    x_nchw: (B, in_chans, H, W)   (PyTorch NCHW convention)
    returns: (B, num_patches, embed_dim)
    """
    B, C, H, W = x_nchw.shape
    Hf, Wf = H // 2, W // 2

    # Stand-in backbone Conv2d(C, F, k=2, s=2): 2x2 patch extract -> (T, C*4),
    # token order b-major then h then w (== NCHW flatten(2).transpose(1,2)).
    # Done in plain XLA so the Pallas input DMA sees a dense contiguous matrix.
    patches = x_nchw.reshape(B, C, Hf, 2, Wf, 2)
    patches = jnp.transpose(patches, (0, 2, 4, 1, 3, 5)).reshape(B * Hf * Wf, C * 4)

    out_tokens = _fused_embed(patches, prep["wc_mat"], prep["bc_row"])  # (T, Ep)

    if out_tokens.shape[1] != embed_dim:         # drop lane pad only if present
        out_tokens = out_tokens[:, :embed_dim]
    return out_tokens.reshape(B, Hf * Wf, embed_dim)


def init_params(key, in_chans, feature_dim, embed_dim, dtype=jnp.float32):
    """Torch-layout parameters (conv weight shapes), as in the reference module."""
    k1, k2, k3, k4 = jax.random.split(key, 4)
    return {
        "backbone_w": jax.random.normal(k1, (feature_dim, in_chans, 2, 2), dtype) * 0.1,
        "backbone_b": jax.random.normal(k2, (feature_dim,), dtype) * 0.1,
        "proj_w": jax.random.normal(k3, (embed_dim, feature_dim, 1, 1), dtype) * 0.1,
        "proj_b": jax.random.normal(k4, (embed_dim,), dtype) * 0.1,
    }


def prepare_params(params):
    """One-time (outside jit) weight prep: fold backbone conv + 1x1 proj into a
    single GEMM (exact because the stand-in backbone is linear) and lane-pad
    the output channels to a multiple of 128."""
    wb = params["backbone_w"]                      # (F, C, 2, 2)
    bb = params["backbone_b"]                      # (F,)
    wp = params["proj_w"]                          # (E, F, 1, 1)
    bp = params["proj_b"]                          # (E,)
    F = wb.shape[0]
    E = wp.shape[0]

    wb_mat = wb.reshape(F, -1).T                   # (Cin, F)
    wp_mat = wp.reshape(E, F).T                    # (F, E)
    wc = jnp.dot(wb_mat, wp_mat, precision=jax.lax.Precision.HIGHEST)    # (Cin, E)
    bc = jnp.dot(bb, wp_mat, precision=jax.lax.Precision.HIGHEST) + bp   # (E,)

    Ep = _round_up(E, 128)                         # lane-dense output stores
    if Ep != E:
        wc = jnp.pad(wc, ((0, 0), (0, Ep - E)))
        bc = jnp.pad(bc, (0, Ep - E))
    return {"wc_mat": wc, "bc_row": bc.reshape(1, Ep)}


if __name__ == "__main__":
    # Small shapes: batch=2, in_chans=4, img=16x16, feature_dim=8, embed_dim=32.
    B, C, H, W = 2, 4, 16, 16
    feature_dim, embed_dim = 8, 32

    key = jax.random.PRNGKey(0)
    kx, kp = jax.random.split(key)
    x = jax.random.normal(kx, (B, C, H, W), jnp.float32)
    params = init_params(kp, C, feature_dim, embed_dim)
    prep = prepare_params(params)                  # once, outside jit

    fwd = jax.jit(functools.partial(hybrid_embed_forward,
                                    prep=prep, embed_dim=embed_dim))
    out = jax.block_until_ready(fwd(x))

    # Reference check in plain JAX (unfolded math, no Pallas).
    Hf, Wf = H // 2, W // 2
    patches = jnp.transpose(x.reshape(B, C, Hf, 2, Wf, 2),
                            (0, 2, 4, 1, 3, 5)).reshape(B * Hf * Wf, C * 4)
    feat = patches @ params["backbone_w"].reshape(feature_dim, -1).T + params["backbone_b"]
    ref = (feat @ params["proj_w"].reshape(embed_dim, feature_dim).T + params["proj_b"]
           ).reshape(B, Hf * Wf, embed_dim)

    assert out.shape == (B, Hf * Wf, embed_dim), out.shape
    assert jnp.allclose(out, ref, atol=1e-4, rtol=1e-4)
    print("KERNEL_OK")
</pallas_src>

<mosaic_0001>
module attributes {stable_mosaic.version = 11 : i64} {
  func.func @_hybrid_embed_kernel(%arg0: i32, %arg1: memref<64x16xf32, #tpu.memory_space<vmem>>, %arg2: memref<16x128xf32, #tpu.memory_space<vmem>>, %arg3: memref<1x128xf32, #tpu.memory_space<vmem>>, %arg4: memref<64x128xf32, #tpu.memory_space<vmem>>) attributes {dimension_semantics = [#tpu.dimension_semantics<parallel>], iteration_bounds = array<i64: 2>, scalar_prefetch = 0 : i64, scratch_operands = 0 : i64, tpu.core_type = #tpu.core_type<tc>, window_params = [{transform_indices = @transform_0, window_bounds = array<i64: 64, 16>}, {pipeline_mode = #tpu.pipeline_mode<synchronous>, transform_indices = @transform_1, window_bounds = array<i64: 16, 128>}, {pipeline_mode = #tpu.pipeline_mode<synchronous>, transform_indices = @transform_2, window_bounds = array<i64: 1, 128>}, {transform_indices = @transform_3, window_bounds = array<i64: 64, 128>}]} {
    %c0 = arith.constant 0 : index
    %c0_0 = arith.constant 0 : index
    %0 = vector.load %arg1[%c0, %c0_0] : memref<64x16xf32, #tpu.memory_space<vmem>>, vector<64x16xf32>
    %c0_1 = arith.constant 0 : index
    %c0_2 = arith.constant 0 : index
    %1 = vector.load %arg2[%c0_1, %c0_2] : memref<16x128xf32, #tpu.memory_space<vmem>>, vector<16x128xf32>
    %cst = arith.constant dense<0.000000e+00> : vector<64x128xf32>
    %2 = tpu.matmul %0, %1, %cst {dimension_numbers = #tpu.dot_dimension_numbers<[1], [0], [0], [1], [0, 0, 1, 1], [], []>} : vector<64x16xf32>, vector<16x128xf32>, vector<64x128xf32> -> vector<64x128xf32>
    %c0_3 = arith.constant 0 : index
    %c0_4 = arith.constant 0 : index
    %3 = vector.load %arg3[%c0_3, %c0_4] : memref<1x128xf32, #tpu.memory_space<vmem>>, vector<1x128xf32>
    %4 = vector.broadcast %3 : vector<1x128xf32> to vector<64x128xf32>
    %5 = arith.addf %2, %4 : vector<64x128xf32>
    %c0_5 = arith.constant 0 : index
    %c0_6 = arith.constant 0 : index
    %6 = vector.load %arg4[%c0_5, %c0_6] : memref<64x128xf32, #tpu.memory_space<vmem>>, vector<64x128xf32>
    tpu.vector_store %arg4[%c0_5, %c0_6], %5 {strides = array<i32>} : memref<64x128xf32, #tpu.memory_space<vmem>>, vector<64x128xf32>,
    return
  }
  func.func @transform_0(%arg0: i32) -> (i32, i32) {
    %c0_i32 = arith.constant 0 : i32
    %c0_i32_0 = arith.constant 0 : i32
    return %arg0, %c0_i32 : i32, i32
  }
  func.func @transform_1(%arg0: i32) -> (i32, i32) {
    %c0_i32 = arith.constant 0 : i32
    %c0_i32_0 = arith.constant 0 : i32
    %c0_i32_1 = arith.constant 0 : i32
    return %c0_i32, %c0_i32_0 : i32, i32
  }
  func.func @transform_2(%arg0: i32) -> (i32, i32) {
    %c0_i32 = arith.constant 0 : i32
    %c0_i32_0 = arith.constant 0 : i32
    %c0_i32_1 = arith.constant 0 : i32
    return %c0_i32, %c0_i32_0 : i32, i32
  }
  func.func @transform_3(%arg0: i32) -> (i32, i32) {
    %c0_i32 = arith.constant 0 : i32
    %c0_i32_0 = arith.constant 0 : i32
    return %arg0, %c0_i32 : i32, i32
  }
}

</mosaic_0001>

<llo_original>
// kernel: hybrid_embed_forward.1
$region0: #{hybrid_embed_forward.1}
  #allocation0 [shape = 'u32[]', space=smem, size = 0x4, offset = 0x4, fixed_abs, tag = 'smem constant byte address 0x4 - core index']
  #allocation1 [shape = 'u32[144,128]{1,0:T(1,128)}', space=vmem, size = 0x12000, scoped, tag = 'internal scratch']
  %s0 = inlined_call_operand.vmem [shape: f32[128,16], index: 0, kind: input, shape index: {}]
  %s1 = inlined_call_operand.vmem [shape: f32[16,128], index: 1, kind: input, shape index: {}]
  %s2 = inlined_call_operand.vmem [shape: f32[1,128], index: 2, kind: input, shape index: {}]
  %s3 = inlined_call_operand.vmem [shape: f32[128,128], index: 3, kind: output, shape index: {}]
  %s4 = sld [smem:[#allocation0]]
  $region45: #{hybrid_embed_forward.1} parent=0
    _
  %s6 = ssub.s32 1, %s4
  %s7 = scalar_select 0, %s6, %s4
  loop: start=0, step=1, limit=4
  $region2: #{hybrid_embed_forward.1} parent=0 // loop_pre_header
    _
  $region3: #{hybrid_embed_forward.1} parent=0 // loop_header
    %s9 = sphi 0, %s13
    %p10 = scmp.ge.s32.totalorder %s9, 4
    %s19 = sphi 0, %s21
    %s22 = sphi 0, %s19
    %s23 = sphi 0, %s22
    %s39 = sphi 0, %s23
    %s43 = sphi 0, %s43
    %s45 = sphi 0, %s43
    %s46 = sphi 0, %s45
    %s60 = sphi 0, %s46
    %s64 = sphi 0, %s64
    %s66 = sphi 0, %s64
    %s67 = sphi 0, %s66
    %s81 = sphi 0, %s67
    %s87 = sphi 0, %s89
    %s90 = sphi 0, %s87
    %s91 = sphi 0, %s90
    %s107 = sphi 0, %s91
  $region4: #{hybrid_embed_forward.1} parent=0 // loop_header_branch
    %12 = sbr.rel (%p10) target = $region8
  $region5: #{hybrid_embed_forward.1} parent=0 // loop_body
    %s14 = ssub.s32 %s9, 1
    %s15 = ssub.s32 %s9, 2
    %s16 = sadd.s32 %s9, 1
    %s17 = ssub.s32 %s9, %s16
    %p18 = scmp.eq.s32.totalorder %s17, 0
    %s20 = sadd.s32 %s19, 1
    %s21 = scalar_select %p18, %s19, %s20
    %p24 = pneg %p18
    %p25 = scmp.eq.s32.totalorder %s9, 1
    %p26 = por %p24, %p25
    %p27 = scmp.ne.s32.totalorder %s19, %s22
    %p28 = scmp.eq.s32.totalorder %s9, 0
    %p29 = por %p27, %p28
    %p30 = scmp.ne.s32.totalorder %s19, %s22
    %p31 = scmp.eq.s32.totalorder %s14, 1
    %p32 = por %p30, %p31
    %p33 = scmp.ne.s32.totalorder %s22, %s23
    %p34 = scmp.eq.s32.totalorder %s14, 0
    %p35 = por %p33, %p34
    %p36 = scmp.ne.s32.totalorder %s22, %s23
    %p37 = scmp.eq.s32.totalorder %s15, 1
    %p38 = por %p36, %p37
    %p40 = scmp.ne.s32.totalorder %s23, %s39
    %p41 = scmp.eq.s32.totalorder %s15, 0
    %p42 = por %p40, %p41
    %s44 = sadd.s32 %s43, 1
    %p47 = scmp.eq.s32.totalorder %s9, 1
    %p48 = scmp.ne.s32.totalorder %s43, %s45
    %p49 = scmp.eq.s32.totalorder %s9, 0
    %p50 = por %p48, %p49
    %p51 = scmp.ne.s32.totalorder %s43, %s45
    %p52 = scmp.eq.s32.totalorder %s14, 1
    %p53 = por %p51, %p52
    %p54 = scmp.ne.s32.totalorder %s45, %s46
    %p55 = scmp.eq.s32.totalorder %s14, 0
    %p56 = por %p54, %p55
    %p57 = scmp.ne.s32.totalorder %s45, %s46
    %p58 = scmp.eq.s32.totalorder %s15, 1
    %p59 = por %p57, %p58
    %p61 = scmp.ne.s32.totalorder %s46, %s60
    %p62 = scmp.eq.s32.totalorder %s15, 0
    %p63 = por %p61, %p62
    %s65 = sadd.s32 %s64, 1
    %p68 = scmp.eq.s32.totalorder %s9, 1
    %p69 = scmp.ne.s32.totalorder %s64, %s66
    %p70 = scmp.eq.s32.totalorder %s9, 0
    %p71 = por %p69, %p70
    %p72 = scmp.ne.s32.totalorder %s64, %s66
    %p73 = scmp.eq.s32.totalorder %s14, 1
    %p74 = por %p72, %p73
    %p75 = scmp.ne.s32.totalorder %s66, %s67
    %p76 = scmp.eq.s32.totalorder %s14, 0
    %p77 = por %p75, %p76
    %p78 = scmp.ne.s32.totalorder %s66, %s67
    %p79 = scmp.eq.s32.totalorder %s15, 1
    %p80 = por %p78, %p79
    %p82 = scmp.ne.s32.totalorder %s67, %s81
    %p83 = scmp.eq.s32.totalorder %s15, 0
    %p84 = por %p82, %p83
    %s85 = ssub.s32 %s9, %s16
    %p86 = scmp.eq.s32.totalorder %s85, 0
    %s88 = sadd.s32 %s87, 1
    %s89 = scalar_select %p86, %s87, %s88
    %p92 = pneg %p86
    %p93 = scmp.eq.s32.totalorder %s9, 1
    %p94 = por %p92, %p93
    %p95 = scmp.ne.s32.totalorder %s87, %s90
    %p96 = scmp.eq.s32.totalorder %s9, 0
    %p97 = por %p95, %p96
    %p98 = scmp.ne.s32.totalorder %s87, %s90
    %p99 = scmp.eq.s32.totalorder %s14, 1
    %p100 = por %p98, %p99
    %p101 = scmp.ne.s32.totalorder %s90, %s91
    %p102 = scmp.eq.s32.totalorder %s14, 0
    %p103 = por %p101, %p102
    %p104 = scmp.ne.s32.totalorder %s90, %s91
    %p105 = scmp.eq.s32.totalorder %s15, 1
    %p106 = por %p104, %p105
    %p108 = scmp.ne.s32.totalorder %s91, %s107
    %p109 = scmp.eq.s32.totalorder %s15, 0
    %p110 = por %p108, %p109
    %p111 = scmp.le.s32.totalorder 1, %s9
    %p112 = scmp.lt.s32.totalorder %s9, 3
    %p113 = pnand %p111, %p112
    %p114 = pneg %p113
    // Predicated region
    $region9: #{hybrid_embed_forward.1} parent=5 // pred_check
      _
    $region10: #{hybrid_embed_forward.1} parent=5 // pred_check_branch
      %116 = sbr.rel (%p113) target = $region12
    $region11: #{hybrid_embed_forward.1} parent=5 // pred_region
      %s117 = ssub.s32 %s9, 1
      // Predicated region
      $region13: #{hybrid_embed_forward.1} parent=11 // pred_check
        %p118 = pneg %p56
      $region14: #{hybrid_embed_forward.1} parent=11 // pred_check_branch
        %120 = sbr.rel (%p118) target = $region16
      $region15: #{hybrid_embed_forward.1} parent=11 // pred_region
        _
      $region16: #{hybrid_embed_forward.1} parent=11 // pred_fallthru
        _
      // Predicated region
      $region17: #{hybrid_embed_forward.1} parent=11 // pred_check
        %p121 = pneg %p77
      $region18: #{hybrid_embed_forward.1} parent=11 // pred_check_branch
        %123 = sbr.rel (%p121) target = $region20
      $region19: #{hybrid_embed_forward.1} parent=11 // pred_region
        _
      $region20: #{hybrid_embed_forward.1} parent=11 // pred_fallthru
        _
    $region12: #{hybrid_embed_forward.1} parent=5 // pred_fallthru
      _
    %p124 = scmp.lt.s32.totalorder %s9, 2
    // Predicated region
    $region21: #{hybrid_embed_forward.1} parent=5 // pred_check
      %p125 = pneg %p124
    $region22: #{hybrid_embed_forward.1} parent=5 // pred_check_branch
      %127 = sbr.rel (%p125) target = $region24
    $region23: #{hybrid_embed_forward.1} parent=5 // pred_region
      // Predicated region
      $region25: #{hybrid_embed_forward.1} parent=23 // pred_check
        %p128 = pneg %p29
      $region26: #{hybrid_embed_forward.1} parent=23 // pred_check_branch
        %130 = sbr.rel (%p128) target = $region28
      $region27: #{hybrid_embed_forward.1} parent=23 // pred_region
        %s131 = smul.u32 8, %s9
        %p132 = scmp.lt.s32.totalorder %s131, 15
        %s133 = scalar_select %p132, %s131, 15
        %s134 = smul.addr %s133, 8
        %s135 = scalar_lea.vmem %s0, %s134
        %s136 = smul.u32 8, %s9
      $region28: #{hybrid_embed_forward.1} parent=23 // pred_fallthru
        _
    $region24: #{hybrid_embed_forward.1} parent=5 // pred_fallthru
      _
    %p137 = scmp.le.s32.totalorder 1, %s9
    %p138 = scmp.lt.s32.totalorder %s9, 3
    %p139 = pnand %p137, %p138
    %p140 = pneg %p139
    // Predicated region
    $region29: #{hybrid_embed_forward.1} parent=5 // pred_check
      _
    $region30: #{hybrid_embed_forward.1} parent=5 // pred_check_branch
      %142 = sbr.rel (%p139) target = $region32
    $region31: #{hybrid_embed_forward.1} parent=5 // pred_region
      %s143 = ssub.s32 %s9, 1
      %s144 = smul.u32 8, %s14
      %p145 = scmp.lt.s32.totalorder %s144, 15
      %s146 = scalar_select %p145, %s144, 15
      %s147 = smul.addr %s146, 8
      %s148 = scalar_lea.vmem %s0, %s147
      %p149 = pneg %p35
      %p150 = pneg %p32
      %p151 = pneg %p56
      %p152 = pneg %p53
      %p153 = pneg %p77
      %p154 = pneg %p74
      %p155 = pneg %p103
      %p156 = pneg %p100
      %s157 = smul.u32 8, %s14
      %p158 = scmp.lt.s32.totalorder %s157, 15
      %s159 = scalar_select %p158, %s157, 15
      %s160 = smul.addr %s159, 8
      %s161 = scalar_lea.vmem %s3, %s160
      %s162 = smul.u32 8, %s14
      %p163 = scmp.lt.s32.totalorder %s162, 15
      %s164 = scalar_select %p163, %s162, 15
      %s165 = smul.addr %s164, 8
      %s166 = scalar_lea.vmem %s0, %s165
      %s167 = smul.u32 8, %s14
      %s168 = smul.u32 8, %s14
      %p169 = scmp.lt.s32.totalorder %s168, 15
      %s170 = scalar_select %p169, %s168, 15
      %s171 = smul.addr %s170, 8
      %s172 = scalar_lea.vmem %s3, %s171
      %s173 = smul.u32 8, %s14
      %v174 = vld [vmem:[%s166] sm:$0xff]
      %v175 = vld [vmem:[%s166 + $0x8] sm:$0xff]
      %v176 = vld [vmem:[%s166 + $0x10] sm:$0xff]
      %v177 = vld [vmem:[%s166 + $0x18] sm:$0xff]
      %v178 = vld [vmem:[%s166 + $0x20] sm:$0xff]
      %v179 = vld [vmem:[%s166 + $0x28] sm:$0xff]
      %v180 = vld [vmem:[%s166 + $0x30] sm:$0xff]
      %v181 = vld [vmem:[%s166 + $0x38] sm:$0xff]
      %v182 = vld [vmem:[%s1] sm:$0xff]
      %v183 = vld [vmem:[%s1 + $0x8] sm:$0xff]
      %v184 = vld [vmem:[%s2] sm:$0x1]
      %v186 = vlaneseq
      %v187 = vshrl.u32 %v186, 7
      %v188 = vsub.s32 0, %v187
      %v189 = vrot.slane %v184, %v188
      %vm191 = vcmask 130048
      %v193 = vsel %vm191, %v174, 0
      %v196 = vsel %vm191, %v175, 0
      %v199 = vsel %vm191, %v176, 0
      %v202 = vsel %vm191, %v177, 0
      %v205 = vsel %vm191, %v178, 0
      %v208 = vsel %vm191, %v179, 0
      %v211 = vsel %vm191, %v180, 0
      %v214 = vsel %vm191, %v181, 0
      %216 = vmatprep.subr.mxu0 0.0
      %217 = vmatpush1.msra.mxu0 0.0
      %218 = vmatprep.subr.mxu0 0.0
      %219 = vmatpush1.msra.mxu0 0.0
      %220 = vmatprep.subr.mxu0 0.0
      %221 = vmatpush1.msra.mxu0 0.0
      %222 = vmatprep.subr.mxu0 0.0
      %223 = vmatpush1.msra.mxu0 0.0
      %224 = vmatprep.subr.mxu0 0.0
      %225 = vmatpush1.msra.mxu0 0.0
      %226 = vmatprep.subr.mxu0 0.0
      %227 = vmatpush1.msra.mxu0 0.0
      %228 = vmatprep.subr.mxu0 0.0
      %229 = vmatpush1.msra.mxu0 0.0
      %230 = vmatprep.subr.mxu0 0.0
      %231 = vmatpush1.msra.mxu0 0.0
      %232 = vmatprep.subr.mxu0 0.0
      %233 = vmatpush1.msra.mxu0 0.0
      %234 = vmatprep.subr.mxu0 0.0
      %235 = vmatpush1.msra.mxu0 0.0
      %236 = vmatprep.subr.mxu0 0.0
      %237 = vmatpush1.msra.mxu0 0.0
      %238 = vmatprep.subr.mxu0 0.0
      %239 = vmatpush1.msra.mxu0 0.0
      %240 = vmatprep.subr.mxu0 0.0
      %241 = vmatpush1.msra.mxu0 0.0
      %242 = vmatprep.subr.mxu0 0.0
      %243 = vmatpush1.msra.mxu0 0.0
      %244 = vmatprep.subr.mxu0 0.0
      %245 = vmatpush1.msra.mxu0 %v183
      %246 = vmatprep.subr.mxu0 0.0
      %247 = vmatpush1.msra.mxu0 %v182
      %248 = vmatprep.subr.mxu0 0.0
      %249 = vmatpush2.msra.mxu0 0.0
      %250 = vmatprep.subr.mxu0 0.0
      %251 = vmatpush2.msra.mxu0 0.0
      %252 = vmatprep.subr.mxu0 0.0
      %253 = vmatpush2.msra.mxu0 0.0
      %254 = vmatprep.subr.mxu0 0.0
      %255 = vmatpush2.msra.mxu0 0.0
      %256 = vmatprep.subr.mxu0 0.0
      %257 = vmatpush2.msra.mxu0 0.0
      %258 = vmatprep.subr.mxu0 0.0
      %259 = vmatpush2.msra.mxu0 0.0
      %260 = vmatprep.subr.mxu0 0.0
      %261 = vmatpush2.msra.mxu0 0.0
      %262 = vmatprep.subr.mxu0 0.0
      %263 = vmatpush2.msra.mxu0 0.0
      %264 = vmatprep.subr.mxu0 0.0
      %265 = vmatpush2.msra.mxu0 0.0
      %266 = vmatprep.subr.mxu0 0.0
      %267 = vmatpush2.msra.mxu0 0.0
      %268 = vmatprep.subr.mxu0 0.0
      %269 = vmatpush2.msra.mxu0 0.0
      %270 = vmatprep.subr.mxu0 0.0
      %271 = vmatpush2.msra.mxu0 0.0
      %272 = vmatprep.subr.mxu0 0.0
      %273 = vmatpush2.msra.mxu0 0.0
      %274 = vmatprep.subr.mxu0 0.0
      %275 = vmatpush2.msra.mxu0 0.0
      %276 = vmatprep.subr.mxu0 0.0
      %277 = vmatpush2.msra.mxu0 0.0
      %278 = vmatprep.subr.mxu0 0.0
      %279 = vmatpush2.msra.mxu0 0.0
      %280 = vmatprep.mubr.f32.mxu0 0.0
      %281 = vmatmul.mubr.f32.gmra.mxu0 %v193
      %v282 = vpop.f32.mrf.mxu0
      %v283 = vadd.f32 %v189, %v282
      %v284 = vpop.f32.mrf.mxu0
      %285 = vmatprep.mubr.f32.mxu0 0.0
      %286 = vmatmul.mubr.f32.gmra.mxu0 %v196
      %v287 = vpop.f32.mrf.mxu0
      %v288 = vadd.f32 %v189, %v287
      %v289 = vpop.f32.mrf.mxu0
      %290 = vmatprep.mubr.f32.mxu0 0.0
      %291 = vmatmul.mubr.f32.gmra.mxu0 %v199
      %v292 = vpop.f32.mrf.mxu0
      %v293 = vadd.f32 %v189, %v292
      %v294 = vpop.f32.mrf.mxu0
      %295 = vmatprep.mubr.f32.mxu0 0.0
      %296 = vmatmul.mubr.f32.gmra.mxu0 %v202
      %v297 = vpop.f32.mrf.mxu0
      %v298 = vadd.f32 %v189, %v297
      %v299 = vpop.f32.mrf.mxu0
      %300 = vmatprep.mubr.f32.mxu0 0.0
      %301 = vmatmul.mubr.f32.gmra.mxu0 %v205
      %v302 = vpop.f32.mrf.mxu0
      %v303 = vadd.f32 %v189, %v302
      %v304 = vpop.f32.mrf.mxu0
      %305 = vmatprep.mubr.f32.mxu0 0.0
      %306 = vmatmul.mubr.f32.gmra.mxu0 %v208
      %v307 = vpop.f32.mrf.mxu0
      %v308 = vadd.f32 %v189, %v307
      %v309 = vpop.f32.mrf.mxu0
      %310 = vmatprep.mubr.f32.mxu0 0.0
      %311 = vmatmul.mubr.f32.gmra.mxu0 %v211
      %v312 = vpop.f32.mrf.mxu0
      %v313 = vadd.f32 %v189, %v312
      %v314 = vpop.f32.mrf.mxu0
      %315 = vmatprep.mubr.f32.mxu0 0.0
      %316 = vmatmul.mubr.f32.gmra.mxu0 %v214
      %v317 = vpop.f32.mrf.mxu0
      %v318 = vadd.f32 %v189, %v317
      %v319 = vpop.f32.mrf.mxu0
      %320 = vdwg.mxu0
      %321 = vst [vmem:[%s172] sm:$0xff] %v283
      %322 = vst [vmem:[%s172 + $0x8] sm:$0xff] %v288
      %323 = vst [vmem:[%s172 + $0x10] sm:$0xff] %v293
      %324 = vst [vmem:[%s172 + $0x18] sm:$0xff] %v298
      %325 = vst [vmem:[%s172 + $0x20] sm:$0xff] %v303
      %326 = vst [vmem:[%s172 + $0x28] sm:$0xff] %v308
      %327 = vst [vmem:[%s172 + $0x30] sm:$0xff] %v313
      %328 = vst [vmem:[%s172 + $0x38] sm:$0xff] %v318
      %s329 = smul.u32 8, %s14
      %p330 = scmp.lt.s32.totalorder %s329, 15
      %s331 = scalar_select %p330, %s329, 15
      %s332 = smul.addr %s331, 8
      %s333 = scalar_lea.vmem %s3, %s332
      // Predicated region
      $region33: #{hybrid_embed_forward.1} parent=31 // pred_check
        %p334 = pneg %p100
      $region34: #{hybrid_embed_forward.1} parent=31 // pred_check_branch
        %336 = sbr.rel (%p334) target = $region36
      $region35: #{hybrid_embed_forward.1} parent=31 // pred_region
        %s337 = smul.u32 8, %s14
      $region36: #{hybrid_embed_forward.1} parent=31 // pred_fallthru
        _
    $region32: #{hybrid_embed_forward.1} parent=5 // pred_fallthru
      _
    %p338 = scmp.le.s32.totalorder 2, %s9
    // Predicated region
    $region37: #{hybrid_embed_forward.1} parent=5 // pred_check
      %p339 = pneg %p338
    $region38: #{hybrid_embed_forward.1} parent=5 // pred_check_branch
      %341 = sbr.rel (%p339) target = $region40
    $region39: #{hybrid_embed_forward.1} parent=5 // pred_region
      %s342 = ssub.s32 %s9, 2
      // Predicated region
      $region41: #{hybrid_embed_forward.1} parent=39 // pred_check
        %p343 = pneg %p106
      $region42: #{hybrid_embed_forward.1} parent=39 // pred_check_branch
        %345 = sbr.rel (%p343) target = $region44
      $region43: #{hybrid_embed_forward.1} parent=39 // pred_region
        %s346 = smul.u32 8, %s15
        %p347 = scmp.lt.s32.totalorder %s346, 15
        %s348 = scalar_select %p347, %s346, 15
        %s349 = smul.addr %s348, 8
        %s350 = scalar_lea.vmem %s3, %s349
      $region44: #{hybrid_embed_forward.1} parent=39 // pred_fallthru
        _
    $region40: #{hybrid_embed_forward.1} parent=5 // pred_fallthru
      _
  $region6: #{hybrid_embed_forward.1} parent=0 // loop_footer
    %s13 = sadd.s32 1, %s9
  $region7: #{hybrid_embed_forward.1} parent=0 // loop_footer_branch
    %8 = sbr.rel target = $region3
  $region8: #{hybrid_embed_forward.1} parent=0 // loop_exit
    _

</llo_original>
